<compile_context>
chip_gen: v7x
topology: tpu7x:2x2x1
jax: 0.10.0
libtpu: 0.0.40
codegen_flags: <defaults>
</compile_context>

<pallas_src>
import functools

import jax
import jax.numpy as jnp
from jax.experimental import pallas as pl
from jax.experimental.pallas import tpu as pltpu


def _elu(x):
    # F.elu with alpha=1.0
    return jnp.where(x > 0.0, x, jnp.exp(jnp.minimum(x, 0.0)) - 1.0)


def _attr_agg_kernel(a_ref, xs_ref, xd_ref, wn_ref, bn_ref, wl_ref, bl_ref,
                     o_ref, acc_ref, deg_ref, *,
                     agg_kind, apply_fc, apply_elu, add_linear):
    k = pl.program_id(1)
    nk = pl.num_programs(1)

    @pl.when(k == 0)
    def _init():
        if agg_kind == "mean":
            acc_ref[...] = jnp.zeros_like(acc_ref)
        else:
            acc_ref[...] = jnp.full_like(acc_ref, -jnp.inf)
        deg_ref[...] = jnp.zeros_like(deg_ref)

    # Adjacency tile lives in HBM/VMEM as bf16 (0/1 exact); upcast in-register so
    # the accumulation matches the f32 reference.
    a = a_ref[...].astype(jnp.float32)                      # [TM, TK]

    # In-degree partial sum on the MXU (ones-matmul) instead of an XLU row-reduce.
    ones = jnp.ones((a.shape[1], 128), dtype=jnp.float32)
    deg_ref[...] += jnp.dot(a, ones, preferred_element_type=jnp.float32)

    if agg_kind == "mean":
        acc_ref[...] += jnp.dot(a, xs_ref[...], preferred_element_type=jnp.float32)
    else:
        # Running max over one bounded [TM, TK, Din] src tile (no full-graph 3D blowup).
        x_src = xs_ref[...]                                  # [TK, Din]
        msgs = jnp.where((a > 0.0)[:, :, None], x_src[None, :, :], -jnp.inf)
        acc_ref[...] = jnp.maximum(acc_ref[...], jnp.max(msgs, axis=1))

    @pl.when(k == nk - 1)
    def _finalize():
        deg = deg_ref[:, 0:1]                                # [TM, 1]
        h = acc_ref[...]
        if agg_kind == "mean":
            # Exact divide (pl.reciprocal(approx=True) would risk the 1e-4 check).
            h = jnp.where(deg > 0.0, h / jnp.maximum(deg, 1.0), 0.0)
        else:
            h = jnp.where(deg > 0.0, h, 0.0)
        if apply_fc:
            h = jnp.dot(h, wn_ref[...], preferred_element_type=jnp.float32) + bn_ref[...]
        if apply_elu:
            h = _elu(h)
        if add_linear:
            lin = jnp.dot(xd_ref[...], wl_ref[...],
                          preferred_element_type=jnp.float32) + bl_ref[...]
            h = h + _elu(lin)
        o_ref[...] = h.astype(o_ref.dtype)


def _round_up(v, m):
    return ((v + m - 1) // m) * m


def _pad2(arr, rows, cols, dtype):
    arr = arr.astype(dtype)
    return jnp.pad(arr, ((0, rows - arr.shape[0]), (0, cols - arr.shape[1])))


def attribute_aggregate(adj, x, w_neigh, b_neigh, w_lin, b_lin, *, aggr,
                        tm_cap=None, tk_cap=None):
    """Pallas implementation of the 'max*/mean*' branches of AttributeAggregate."""
    if aggr in ("mean", "max"):
        agg_kind, apply_fc, apply_elu, add_linear = aggr, True, True, False
    elif aggr in ("mean_1", "max_1"):
        agg_kind, apply_fc, apply_elu, add_linear = aggr[:-2], False, False, False
    elif aggr in ("mean_2", "max_2"):
        agg_kind, apply_fc, apply_elu, add_linear = aggr[:-2], True, False, False
    elif aggr in ("mean_3", "max_3"):
        agg_kind, apply_fc, apply_elu, add_linear = aggr[:-2], True, True, True
    else:
        raise NotImplementedError(f"aggr={aggr!r} not supported in the Pallas port")

    n, din = x.shape
    dout = w_neigh.shape[1]
    din_p, dout_p = _round_up(din, 128), _round_up(dout, 128)

    # Tile selection: TK is the lane dim of the A block (multiple of 128); TM is a
    # sublane-dim power of two <=128 so it divides any 128-multiple padded N.
    # The max path keeps TM*TK small so the [TM, TK, Din] select/max slab stays bounded.
    n_p = _round_up(max(n, 1), 128)
    if agg_kind == "mean":
        tm = tm_cap or 128
        tk_want = tk_cap or 512
    else:
        tm = tm_cap or 64
        tk_want = tk_cap or 128
    tk = min(tk_want, n_p)
    if n_p % tk != 0:
        tk = 128
    assert tm % 8 == 0 and tk % 128 == 0 and n_p % tm == 0 and n_p % tk == 0

    out_p = dout_p if apply_fc else din_p
    out_dim = dout if apply_fc else din

    a_p = _pad2(adj, n_p, n_p, jnp.bfloat16)           # 0/1 is exact in bf16
    x_p = _pad2(x, n_p, din_p, jnp.float32)
    wn_p = _pad2(w_neigh, din_p, dout_p, jnp.float32)
    bn_p = _pad2(b_neigh, 1, dout_p, jnp.float32)
    wl_p = _pad2(w_lin, din_p, dout_p, jnp.float32)
    bl_p = _pad2(b_lin, 1, dout_p, jnp.float32)

    kernel = functools.partial(
        _attr_agg_kernel, agg_kind=agg_kind, apply_fc=apply_fc,
        apply_elu=apply_elu, add_linear=add_linear)

    grid = (n_p // tm, n_p // tk)
    out = pl.pallas_call(
        kernel,
        out_shape=jax.ShapeDtypeStruct((n_p, out_p), jnp.float32),
        grid_spec=pltpu.PrefetchScalarGridSpec(
            num_scalar_prefetch=0,
            grid=grid,
            in_specs=[
                pl.BlockSpec((tm, tk), lambda i, k: (i, k)),         # A[dst, src] tile
                pl.BlockSpec((tk, din_p), lambda i, k: (k, 0)),      # x, src rows
                pl.BlockSpec((tm, din_p), lambda i, k: (i, 0)),      # x, dst rows (residual)
                pl.BlockSpec((din_p, dout_p), lambda i, k: (0, 0)),  # W_neigh
                pl.BlockSpec((1, dout_p), lambda i, k: (0, 0)),      # b_neigh
                pl.BlockSpec((din_p, dout_p), lambda i, k: (0, 0)),  # W_lin
                pl.BlockSpec((1, dout_p), lambda i, k: (0, 0)),      # b_lin
            ],
            out_specs=pl.BlockSpec((tm, out_p), lambda i, k: (i, 0)),
            scratch_shapes=[
                pltpu.VMEM((tm, din_p), jnp.float32),   # aggregation accumulator
                pltpu.VMEM((tm, 128), jnp.float32),     # in-degree accumulator
            ]),
        compiler_params=pltpu.CompilerParams(
            dimension_semantics=("parallel", "arbitrary"),
            vmem_limit_bytes=48 * 1024 * 1024),
    )(a_p, x_p, x_p, wn_p, bn_p, wl_p, bl_p)

    return out[:n, :out_dim]


def _reference(adj, x, w_neigh, b_neigh, w_lin, b_lin, *, aggr):
    """Pure-JAX reference mirroring the PyTorch/DGL semantics."""
    a = adj.astype(jnp.float32)
    xf = x.astype(jnp.float32)
    dot = functools.partial(jnp.dot, precision=jax.lax.Precision.HIGHEST)
    if aggr.startswith("mean"):
        deg = jnp.sum(a, axis=-1, keepdims=True)
        h = jnp.where(deg > 0, dot(a, xf) / jnp.maximum(deg, 1.0), 0.0)
    else:
        mask = a > 0
        msgs = jnp.where(mask[:, :, None], xf[None, :, :], -jnp.inf)
        h = jnp.max(msgs, axis=1)
        h = jnp.where(jnp.any(mask, axis=1, keepdims=True), h, 0.0)
    if aggr in ("mean", "max"):
        h = jax.nn.elu(dot(h, w_neigh) + b_neigh[0])
    elif aggr.endswith("_2"):
        h = dot(h, w_neigh) + b_neigh[0]
    elif aggr.endswith("_3"):
        h = jax.nn.elu(dot(h, w_neigh) + b_neigh[0]) + jax.nn.elu(dot(xf, w_lin) + b_lin[0])
    return h


def _make_inputs(key, n, din, dout):
    k_adj, k_x, k_wn, k_bn, k_wl, k_bl = jax.random.split(key, 6)
    rand = jax.random.uniform(k_adj, (n, n))
    adj = (rand + rand.T > 1.2).astype(jnp.float32)
    adj = jnp.maximum(adj, jnp.eye(n, dtype=jnp.float32))
    adj = adj.at[:2, :].set(0.0)   # a couple of zero-in-degree nodes
    x = jax.random.normal(k_x, (n, din), dtype=jnp.float32)
    w_neigh = jax.random.normal(k_wn, (din, dout), dtype=jnp.float32) * 0.1
    b_neigh = jax.random.normal(k_bn, (1, dout), dtype=jnp.float32) * 0.1
    w_lin = jax.random.normal(k_wl, (din, dout), dtype=jnp.float32) * 0.1
    b_lin = jax.random.normal(k_bl, (1, dout), dtype=jnp.float32) * 0.1
    return adj, x, w_neigh, b_neigh, w_lin, b_lin


if __name__ == "__main__":
    key = jax.random.PRNGKey(0)
    k_small, k_big = jax.random.split(key)
    ok = True

    all_aggrs = ("mean", "max", "mean_1", "max_1", "mean_2", "max_2", "mean_3", "max_3")

    # Small config (module-scale toy sizes), tight tolerance.
    inputs_small = _make_inputs(k_small, n=16, din=32, dout=32)
    for aggr in all_aggrs:
        out = jax.block_until_ready(attribute_aggregate(*inputs_small, aggr=aggr))
        ref = _reference(*inputs_small, aggr=aggr)
        if not jnp.allclose(out, ref, atol=1e-4, rtol=1e-4):
            ok = False
            print(f"MISMATCH small aggr={aggr}: "
                  f"max_err={float(jnp.max(jnp.abs(out - ref)))}")

    # Larger config with forced small tiles so the grid has multiple dst tiles and
    # multiple src/contraction tiles (exercises pl.when init/accumulate/finalize).
    inputs_big = _make_inputs(k_big, n=200, din=40, dout=40)
    for aggr in ("mean", "max_3"):
        out = jax.block_until_ready(
            attribute_aggregate(*inputs_big, aggr=aggr, tm_cap=64, tk_cap=128))
        ref = _reference(*inputs_big, aggr=aggr)
        if not jnp.allclose(out, ref, atol=1e-2, rtol=1e-2):
            ok = False
            print(f"MISMATCH big aggr={aggr}: "
                  f"max_err={float(jnp.max(jnp.abs(out - ref)))}")

    if ok:
        print("KERNEL_OK")
</pallas_src>

<mosaic_0001>
module attributes {stable_mosaic.version = 11 : i64} {
  func.func @_attr_agg_kernel(%arg0: i32, %arg1: i32, %arg2: memref<128x128xbf16, #tpu.memory_space<vmem>>, %arg3: memref<128x128xf32, #tpu.memory_space<vmem>>, %arg4: memref<128x128xf32, #tpu.memory_space<vmem>>, %arg5: memref<128x128xf32, #tpu.memory_space<vmem>>, %arg6: memref<1x128xf32, #tpu.memory_space<vmem>>, %arg7: memref<128x128xf32, #tpu.memory_space<vmem>>, %arg8: memref<1x128xf32, #tpu.memory_space<vmem>>, %arg9: memref<128x128xf32, #tpu.memory_space<vmem>>, %arg10: memref<128x128xf32, #tpu.memory_space<vmem>>, %arg11: memref<128x128xf32, #tpu.memory_space<vmem>>) attributes {dimension_semantics = [#tpu.dimension_semantics<parallel>, #tpu.dimension_semantics<arbitrary>], iteration_bounds = array<i64: 1, 1>, scalar_prefetch = 0 : i64, scratch_operands = 2 : i64, tpu.core_type = #tpu.core_type<tc>, window_params = [{transform_indices = @transform_0, window_bounds = array<i64: 128, 128>}, {transform_indices = @transform_1, window_bounds = array<i64: 128, 128>}, {transform_indices = @transform_2, window_bounds = array<i64: 128, 128>}, {pipeline_mode = #tpu.pipeline_mode<synchronous>, transform_indices = @transform_3, window_bounds = array<i64: 128, 128>}, {pipeline_mode = #tpu.pipeline_mode<synchronous>, transform_indices = @transform_4, window_bounds = array<i64: 1, 128>}, {pipeline_mode = #tpu.pipeline_mode<synchronous>, transform_indices = @transform_5, window_bounds = array<i64: 128, 128>}, {pipeline_mode = #tpu.pipeline_mode<synchronous>, transform_indices = @transform_6, window_bounds = array<i64: 1, 128>}, {transform_indices = @transform_7, window_bounds = array<i64: 128, 128>}]} {
    %c0_i32 = arith.constant 0 : i32
    %0 = arith.cmpi eq, %arg1, %c0_i32 : i32
    %1 = arith.extui %0 : i1 to i32
    %c0_i32_0 = arith.constant 0 : i32
    %2 = arith.cmpi ne, %1, %c0_i32_0 : i32
    scf.if %2 {
      %cst_16 = arith.constant 0.000000e+00 : f32
      %18 = vector.broadcast %cst_16 : f32 to vector<128x128xf32>
      %c0_17 = arith.constant 0 : index
      %c0_18 = arith.constant 0 : index
      %19 = vector.load %arg10[%c0_17, %c0_18] : memref<128x128xf32, #tpu.memory_space<vmem>>, vector<128x128xf32>
      tpu.vector_store %arg10[%c0_17, %c0_18], %18 {strides = array<i32>} : memref<128x128xf32, #tpu.memory_space<vmem>>, vector<128x128xf32>,
      %cst_19 = arith.constant 0.000000e+00 : f32
      %20 = vector.broadcast %cst_19 : f32 to vector<128x128xf32>
      %c0_20 = arith.constant 0 : index
      %c0_21 = arith.constant 0 : index
      %21 = vector.load %arg11[%c0_20, %c0_21] : memref<128x128xf32, #tpu.memory_space<vmem>>, vector<128x128xf32>
      tpu.vector_store %arg11[%c0_20, %c0_21], %20 {strides = array<i32>} : memref<128x128xf32, #tpu.memory_space<vmem>>, vector<128x128xf32>,
    } else {
    }
    %c0 = arith.constant 0 : index
    %c0_1 = arith.constant 0 : index
    %3 = vector.load %arg2[%c0, %c0_1] : memref<128x128xbf16, #tpu.memory_space<vmem>>, vector<128x128xbf16>
    %4 = arith.extf %3 : vector<128x128xbf16> to vector<128x128xf32>
    %cst = arith.constant 1.000000e+00 : f32
    %5 = vector.broadcast %cst : f32 to vector<128x128xf32>
    %c0_2 = arith.constant 0 : index
    %c0_3 = arith.constant 0 : index
    %6 = vector.load %arg11[%c0_2, %c0_3] : memref<128x128xf32, #tpu.memory_space<vmem>>, vector<128x128xf32>
    %cst_4 = arith.constant dense<0.000000e+00> : vector<128x128xf32>
    %7 = tpu.matmul %4, %5, %cst_4 {dimension_numbers = #tpu.dot_dimension_numbers<[1], [0], [0], [1], [0, 0, 1, 1], [], []>} : vector<128x128xf32>, vector<128x128xf32>, vector<128x128xf32> -> vector<128x128xf32>
    %8 = arith.addf %6, %7 : vector<128x128xf32>
    %c0_5 = arith.constant 0 : index
    %c0_6 = arith.constant 0 : index
    %9 = vector.load %arg11[%c0_5, %c0_6] : memref<128x128xf32, #tpu.memory_space<vmem>>, vector<128x128xf32>
    tpu.vector_store %arg11[%c0_5, %c0_6], %8 {strides = array<i32>} : memref<128x128xf32, #tpu.memory_space<vmem>>, vector<128x128xf32>,
    %c0_7 = arith.constant 0 : index
    %c0_8 = arith.constant 0 : index
    %10 = vector.load %arg10[%c0_7, %c0_8] : memref<128x128xf32, #tpu.memory_space<vmem>>, vector<128x128xf32>
    %c0_9 = arith.constant 0 : index
    %c0_10 = arith.constant 0 : index
    %11 = vector.load %arg3[%c0_9, %c0_10] : memref<128x128xf32, #tpu.memory_space<vmem>>, vector<128x128xf32>
    %cst_11 = arith.constant dense<0.000000e+00> : vector<128x128xf32>
    %12 = tpu.matmul %4, %11, %cst_11 {dimension_numbers = #tpu.dot_dimension_numbers<[1], [0], [0], [1], [0, 0, 1, 1], [], []>} : vector<128x128xf32>, vector<128x128xf32>, vector<128x128xf32> -> vector<128x128xf32>
    %13 = arith.addf %10, %12 : vector<128x128xf32>
    %c0_12 = arith.constant 0 : index
    %c0_13 = arith.constant 0 : index
    %14 = vector.load %arg10[%c0_12, %c0_13] : memref<128x128xf32, #tpu.memory_space<vmem>>, vector<128x128xf32>
    tpu.vector_store %arg10[%c0_12, %c0_13], %13 {strides = array<i32>} : memref<128x128xf32, #tpu.memory_space<vmem>>, vector<128x128xf32>,
    %c0_i32_14 = arith.constant 0 : i32
    %15 = arith.cmpi eq, %arg1, %c0_i32_14 : i32
    %16 = arith.extui %15 : i1 to i32
    %c0_i32_15 = arith.constant 0 : i32
    %17 = arith.cmpi ne, %16, %c0_i32_15 : i32
    scf.if %17 {
      %c0_16 = arith.constant 0 : index
      %c0_17 = arith.constant 0 : index
      %18 = vector.load %arg11[%c0_16, %c0_17] : memref<128x128xf32, #tpu.memory_space<vmem>>, vector<128x1xf32>
      %c0_18 = arith.constant 0 : index
      %c0_19 = arith.constant 0 : index
      %19 = vector.load %arg10[%c0_18, %c0_19] : memref<128x128xf32, #tpu.memory_space<vmem>>, vector<128x128xf32>
      %cst_20 = arith.constant 0.000000e+00 : f32
      %20 = vector.broadcast %cst_20 : f32 to vector<128x1xf32>
      %21 = arith.cmpf ogt, %18, %20 : vector<128x1xf32>
      %cst_21 = arith.constant 1.000000e+00 : f32
      %22 = vector.broadcast %cst_21 : f32 to vector<128x1xf32>
      %23 = arith.maximumf %18, %22 : vector<128x1xf32>
      %24 = vector.broadcast %23 : vector<128x1xf32> to vector<128x128xf32>
      %25 = arith.divf %19, %24 : vector<128x128xf32>
      %cst_22 = arith.constant 0.000000e+00 : f32
      %26 = vector.shape_cast %21 : vector<128x1xi1> to vector<128x1xi1>
      %27 = vector.broadcast %26 : vector<128x1xi1> to vector<128x128xi1>
      %28 = vector.broadcast %cst_22 : f32 to vector<128x128xf32>
      %29 = arith.select %27, %25, %28 : vector<128x128xi1>, vector<128x128xf32>
      %c0_23 = arith.constant 0 : index
      %c0_24 = arith.constant 0 : index
      %30 = vector.load %arg5[%c0_23, %c0_24] : memref<128x128xf32, #tpu.memory_space<vmem>>, vector<128x128xf32>
      %cst_25 = arith.constant dense<0.000000e+00> : vector<128x128xf32>
      %31 = tpu.matmul %29, %30, %cst_25 {dimension_numbers = #tpu.dot_dimension_numbers<[1], [0], [0], [1], [0, 0, 1, 1], [], []>} : vector<128x128xf32>, vector<128x128xf32>, vector<128x128xf32> -> vector<128x128xf32>
      %c0_26 = arith.constant 0 : index
      %c0_27 = arith.constant 0 : index
      %32 = vector.load %arg6[%c0_26, %c0_27] : memref<1x128xf32, #tpu.memory_space<vmem>>, vector<1x128xf32>
      %33 = vector.broadcast %32 : vector<1x128xf32> to vector<128x128xf32>
      %34 = arith.addf %31, %33 : vector<128x128xf32>
      %cst_28 = arith.constant 0.000000e+00 : f32
      %35 = vector.broadcast %cst_28 : f32 to vector<128x128xf32>
      %36 = arith.cmpf ogt, %34, %35 : vector<128x128xf32>
      %cst_29 = arith.constant 0.000000e+00 : f32
      %37 = vector.broadcast %cst_29 : f32 to vector<128x128xf32>
      %38 = arith.minimumf %34, %37 : vector<128x128xf32>
      %39 = math.exp %38 : vector<128x128xf32>
      %cst_30 = arith.constant 1.000000e+00 : f32
      %40 = vector.broadcast %cst_30 : f32 to vector<128x128xf32>
      %41 = arith.subf %39, %40 : vector<128x128xf32>
      %42 = arith.select %36, %34, %41 : vector<128x128xi1>, vector<128x128xf32>
      %c0_31 = arith.constant 0 : index
      %c0_32 = arith.constant 0 : index
      %43 = vector.load %arg9[%c0_31, %c0_32] : memref<128x128xf32, #tpu.memory_space<vmem>>, vector<128x128xf32>
      tpu.vector_store %arg9[%c0_31, %c0_32], %42 {strides = array<i32>} : memref<128x128xf32, #tpu.memory_space<vmem>>, vector<128x128xf32>,
    } else {
    }
    return
  }
  func.func @transform_0(%arg0: i32, %arg1: i32) -> (i32, i32) {
    %c0_i32 = arith.constant 0 : i32
    return %arg0, %arg1 : i32, i32
  }
  func.func @transform_1(%arg0: i32, %arg1: i32) -> (i32, i32) {
    %c0_i32 = arith.constant 0 : i32
    %c0_i32_0 = arith.constant 0 : i32
    return %arg1, %c0_i32 : i32, i32
  }
  func.func @transform_2(%arg0: i32, %arg1: i32) -> (i32, i32) {
    %c0_i32 = arith.constant 0 : i32
    %c0_i32_0 = arith.constant 0 : i32
    return %arg0, %c0_i32 : i32, i32
  }
  func.func @transform_3(%arg0: i32, %arg1: i32) -> (i32, i32) {
    %c0_i32 = arith.constant 0 : i32
    %c0_i32_0 = arith.constant 0 : i32
    %c0_i32_1 = arith.constant 0 : i32
    return %c0_i32, %c0_i32_0 : i32, i32
  }
  func.func @transform_4(%arg0: i32, %arg1: i32) -> (i32, i32) {
    %c0_i32 = arith.constant 0 : i32
    %c0_i32_0 = arith.constant 0 : i32
    %c0_i32_1 = arith.constant 0 : i32
    return %c0_i32, %c0_i32_0 : i32, i32
  }
  func.func @transform_5(%arg0: i32, %arg1: i32) -> (i32, i32) {
    %c0_i32 = arith.constant 0 : i32
    %c0_i32_0 = arith.constant 0 : i32
    %c0_i32_1 = arith.constant 0 : i32
    return %c0_i32, %c0_i32_0 : i32, i32
  }
  func.func @transform_6(%arg0: i32, %arg1: i32) -> (i32, i32) {
    %c0_i32 = arith.constant 0 : i32
    %c0_i32_0 = arith.constant 0 : i32
    %c0_i32_1 = arith.constant 0 : i32
    return %c0_i32, %c0_i32_0 : i32, i32
  }
  func.func @transform_7(%arg0: i32, %arg1: i32) -> (i32, i32) {
    %c0_i32 = arith.constant 0 : i32
    %c0_i32_0 = arith.constant 0 : i32
    return %arg0, %c0_i32 : i32, i32
  }
}

</mosaic_0001>

<llo_original>
// kernel: tpu_custom_call.1
$region0: #{tpu_custom_call.1}
  #allocation0 [shape = 'u32[]', space=smem, size = 0x4, offset = 0x4, fixed_abs, tag = 'smem constant byte address 0x4 - core index']
  #allocation1 [shape = 'u32[144,128]{1,0:T(1,128)}', space=vmem, size = 0x12000, scoped, tag = 'internal scratch']
  #allocation2 [shape = 'f32[128,128]{1,0:T(8,128)}', space=vmem, size = 0x10000, scoped, tag = 'scratch operand']
  #allocation3 [shape = 'f32[128,128]{1,0:T(8,128)}', space=vmem, size = 0x10000, scoped, tag = 'scratch operand']
  %s0 = inlined_call_operand.hbm [shape: bf16[128,128], index: 0, kind: input, shape index: {}]
  %s1 = inlined_call_operand.hbm [shape: f32[128,128], index: 1, kind: input, shape index: {}]
  %s2 = inlined_call_operand.hbm [shape: f32[128,128], index: 2, kind: input, shape index: {}]
  %s3 = inlined_call_operand.hbm [shape: f32[128,128], index: 3, kind: input, shape index: {}]
  %s4 = inlined_call_operand.vmem [shape: f32[1,128], index: 4, kind: input, shape index: {}]
  %s5 = inlined_call_operand.hbm [shape: f32[128,128], index: 5, kind: input, shape index: {}]
  %s6 = inlined_call_operand.vmem [shape: f32[1,128], index: 6, kind: input, shape index: {}]
  %s7 = inlined_call_operand.hbm [shape: f32[128,128], index: 7, kind: output, shape index: {}]
  %s8 = sld [smem:[#allocation0]]
  $region66: #{tpu_custom_call.1} parent=0
    _
  %s10 = ssub.s32 1, %s8
  %s11 = scalar_select 0, %s10, %s8
  $region1: #{tpu_custom_call.1} parent=0
    #allocation4 [shape = 'u8[32768]{0}', space=vmem, size = 0x8000, scoped, tag = 'input window, operand 0, single buffered']
    #allocation5 [shape = 's32[1]{0}', space=sflag, size = 0x4, scoped, tag = 'scoped memory for tpu_custom_call.1']
    #allocation6 [shape = 's32[1]{0}', space=sflag, size = 0x4, scoped, tag = 'scoped memory for tpu_custom_call.1']
    #allocation7 [shape = 'u8[65536]{0}', space=vmem, size = 0x10000, scoped, tag = 'input window, operand 1, single buffered']
    #allocation8 [shape = 's32[1]{0}', space=sflag, size = 0x4, scoped, tag = 'scoped memory for tpu_custom_call.1']
    #allocation9 [shape = 'u8[65536]{0}', space=vmem, size = 0x10000, scoped, tag = 'input window, operand 2, single buffered']
    #allocation10 [shape = 'u8[65536]{0}', space=vmem, size = 0x10000, scoped, tag = 'input window, operand 3, single buffered']
    #allocation11 [shape = 's32[1]{0}', space=sflag, size = 0x4, scoped, tag = 'scoped memory for tpu_custom_call.1']
    #allocation12 [shape = 'u8[65536]{0}', space=vmem, size = 0x10000, scoped, tag = 'input window, operand 5, single buffered']
    #allocation13 [shape = 'u8[65536]{0}', space=vmem, size = 0x10000, scoped, tag = 'output window, operand 0, single buffered']
    %12 = vsyncpa [#allocation5], 0
    %13 = vsyncpa [#allocation8], 0
    %14 = vsyncpa [#allocation11], 0
    %15 = vsyncpa [#allocation6], 0
    // Predicated region
    $region2: #{tpu_custom_call.1} parent=1 // pred_check
      _
    $region3: #{tpu_custom_call.1} parent=1 // pred_check_branch
      %17 = sbr.rel (0) target = $region5
    $region4: #{tpu_custom_call.1} parent=1 // pred_region
      %s19 = ssub.s32 1024, 1024
      %20 = vsyncadd [#allocation5], %s19
      %s21 = sshll.u32 [#allocation4], 4
      %s22 = int_to_ptr.vmem [resolvable:$true] %s21
      %27 = dma.hbm_to_vmem [thread:$0]  %s0, 1024, %s22, [#allocation5], 64, 64, 4
    $region5: #{tpu_custom_call.1} parent=1 // pred_fallthru
      _
    // Predicated region
    $region6: #{tpu_custom_call.1} parent=1 // pred_check
      _
    $region7: #{tpu_custom_call.1} parent=1 // pred_check_branch
      %29 = sbr.rel (0) target = $region9
    $region8: #{tpu_custom_call.1} parent=1 // pred_region
      %s31 = ssub.s32 2048, 2048
      %32 = vsyncadd [#allocation8], %s31
      %s33 = sshll.u32 [#allocation7], 4
      %s34 = int_to_ptr.vmem [resolvable:$true] %s33
      %39 = dma.hbm_to_vmem [thread:$0]  %s1, 2048, %s34, [#allocation8], 128, 128, 8
    $region9: #{tpu_custom_call.1} parent=1 // pred_fallthru
      _
    // Predicated region
    $region10: #{tpu_custom_call.1} parent=1 // pred_check
      _
    $region11: #{tpu_custom_call.1} parent=1 // pred_check_branch
      %41 = sbr.rel (0) target = $region13
    $region12: #{tpu_custom_call.1} parent=1 // pred_region
      %s43 = ssub.s32 2048, 2048
      %44 = vsyncadd [#allocation8], %s43
      %s45 = sshll.u32 [#allocation9], 4
      %s46 = int_to_ptr.vmem [resolvable:$true] %s45
      %51 = dma.hbm_to_vmem [thread:$0]  %s2, 2048, %s46, [#allocation8], 128, 128, 8
    $region13: #{tpu_custom_call.1} parent=1 // pred_fallthru
      _
    // Predicated region
    $region14: #{tpu_custom_call.1} parent=1 // pred_check
      _
    $region15: #{tpu_custom_call.1} parent=1 // pred_check_branch
      %53 = sbr.rel (0) target = $region17
    $region16: #{tpu_custom_call.1} parent=1 // pred_region
      %s55 = ssub.s32 2048, 2048
      %56 = vsyncadd [#allocation11], %s55
      %s57 = sshll.u32 [#allocation10], 4
      %s58 = int_to_ptr.vmem [resolvable:$true] %s57
      %63 = dma.hbm_to_vmem [thread:$0]  %s3, 2048, %s58, [#allocation11], 128, 128, 8
    $region17: #{tpu_custom_call.1} parent=1 // pred_fallthru
      _
    // Predicated region
    $region18: #{tpu_custom_call.1} parent=1 // pred_check
      _
    $region19: #{tpu_custom_call.1} parent=1 // pred_check_branch
      %65 = sbr.rel (0) target = $region21
    $region20: #{tpu_custom_call.1} parent=1 // pred_region
      _
    $region21: #{tpu_custom_call.1} parent=1 // pred_fallthru
      _
    // Predicated region
    $region22: #{tpu_custom_call.1} parent=1 // pred_check
      _
    $region23: #{tpu_custom_call.1} parent=1 // pred_check_branch
      %67 = sbr.rel (0) target = $region25
    $region24: #{tpu_custom_call.1} parent=1 // pred_region
      %s69 = ssub.s32 2048, 2048
      %70 = vsyncadd [#allocation11], %s69
      %s71 = sshll.u32 [#allocation12], 4
      %s72 = int_to_ptr.vmem [resolvable:$true] %s71
      %77 = dma.hbm_to_vmem [thread:$0]  %s5, 2048, %s72, [#allocation11], 128, 128, 8
    $region25: #{tpu_custom_call.1} parent=1 // pred_fallthru
      _
    // Predicated region
    $region26: #{tpu_custom_call.1} parent=1 // pred_check
      _
    $region27: #{tpu_custom_call.1} parent=1 // pred_check_branch
      %79 = sbr.rel (0) target = $region29
    $region28: #{tpu_custom_call.1} parent=1 // pred_region
      _
    $region29: #{tpu_custom_call.1} parent=1 // pred_fallthru
      _
    // Predicated region
    $region30: #{tpu_custom_call.1} parent=1 // pred_check
      _
    $region31: #{tpu_custom_call.1} parent=1 // pred_check_branch
      %81 = sbr.rel (0) target = $region33
    $region32: #{tpu_custom_call.1} parent=1 // pred_region
      %82 = dma.done [#allocation5], 1024
    $region33: #{tpu_custom_call.1} parent=1 // pred_fallthru
      _
    // Predicated region
    $region34: #{tpu_custom_call.1} parent=1 // pred_check
      _
    $region35: #{tpu_custom_call.1} parent=1 // pred_check_branch
      %84 = sbr.rel (0) target = $region37
    $region36: #{tpu_custom_call.1} parent=1 // pred_region
      %85 = dma.done [#allocation8], 2048
    $region37: #{tpu_custom_call.1} parent=1 // pred_fallthru
      _
    // Predicated region
    $region38: #{tpu_custom_call.1} parent=1 // pred_check
      _
    $region39: #{tpu_custom_call.1} parent=1 // pred_check_branch
      %87 = sbr.rel (0) target = $region41
    $region40: #{tpu_custom_call.1} parent=1 // pred_region
      %88 = dma.done [#allocation8], 2048
    $region41: #{tpu_custom_call.1} parent=1 // pred_fallthru
      _
    // Predicated region
    $region42: #{tpu_custom_call.1} parent=1 // pred_check
      _
    $region43: #{tpu_custom_call.1} parent=1 // pred_check_branch
      %90 = sbr.rel (0) target = $region45
    $region44: #{tpu_custom_call.1} parent=1 // pred_region
      %91 = dma.done [#allocation11], 2048
    $region45: #{tpu_custom_call.1} parent=1 // pred_fallthru
      _
    // Predicated region
    $region46: #{tpu_custom_call.1} parent=1 // pred_check
      _
    $region47: #{tpu_custom_call.1} parent=1 // pred_check_branch
      %93 = sbr.rel (0) target = $region49
    $region48: #{tpu_custom_call.1} parent=1 // pred_region
      %94 = dma.done [#allocation11], 2048
    $region49: #{tpu_custom_call.1} parent=1 // pred_fallthru
      _
    %p95 = scmp.eq.s32.totalorder 0, 0
    // Predicated region
    $region50: #{tpu_custom_call.1} parent=1 // pred_check
      %p96 = pneg %p95
    $region51: #{tpu_custom_call.1} parent=1 // pred_check_branch
      %98 = sbr.rel (%p96) target = $region53
    $region52: #{tpu_custom_call.1} parent=1 // pred_region
      %99 = vst [vmem:[#allocation2] sm:$0xff] 0.0
      %100 = vst [vmem:[#allocation2 + $0x8] sm:$0xff] 0.0
      %101 = vst [vmem:[#allocation2 + $0x10] sm:$0xff] 0.0
      %102 = vst [vmem:[#allocation2 + $0x18] sm:$0xff] 0.0
      %103 = vst [vmem:[#allocation2 + $0x20] sm:$0xff] 0.0
      %104 = vst [vmem:[#allocation2 + $0x28] sm:$0xff] 0.0
      %105 = vst [vmem:[#allocation2 + $0x30] sm:$0xff] 0.0
      %106 = vst [vmem:[#allocation2 + $0x38] sm:$0xff] 0.0
      %107 = vst [vmem:[#allocation2 + $0x40] sm:$0xff] 0.0
      %108 = vst [vmem:[#allocation2 + $0x48] sm:$0xff] 0.0
      %109 = vst [vmem:[#allocation2 + $0x50] sm:$0xff] 0.0
      %110 = vst [vmem:[#allocation2 + $0x58] sm:$0xff] 0.0
      %111 = vst [vmem:[#allocation2 + $0x60] sm:$0xff] 0.0
      %112 = vst [vmem:[#allocation2 + $0x68] sm:$0xff] 0.0
      %113 = vst [vmem:[#allocation2 + $0x70] sm:$0xff] 0.0
      %114 = vst [vmem:[#allocation2 + $0x78] sm:$0xff] 0.0
      %115 = vst [vmem:[#allocation3] sm:$0xff] 0.0
      %116 = vst [vmem:[#allocation3 + $0x8] sm:$0xff] 0.0
      %117 = vst [vmem:[#allocation3 + $0x10] sm:$0xff] 0.0
      %118 = vst [vmem:[#allocation3 + $0x18] sm:$0xff] 0.0
      %119 = vst [vmem:[#allocation3 + $0x20] sm:$0xff] 0.0
      %120 = vst [vmem:[#allocation3 + $0x28] sm:$0xff] 0.0
      %121 = vst [vmem:[#allocation3 + $0x30] sm:$0xff] 0.0
      %122 = vst [vmem:[#allocation3 + $0x38] sm:$0xff] 0.0
      %123 = vst [vmem:[#allocation3 + $0x40] sm:$0xff] 0.0
      %124 = vst [vmem:[#allocation3 + $0x48] sm:$0xff] 0.0
      %125 = vst [vmem:[#allocation3 + $0x50] sm:$0xff] 0.0
      %126 = vst [vmem:[#allocation3 + $0x58] sm:$0xff] 0.0
      %127 = vst [vmem:[#allocation3 + $0x60] sm:$0xff] 0.0
      %128 = vst [vmem:[#allocation3 + $0x68] sm:$0xff] 0.0
      %129 = vst [vmem:[#allocation3 + $0x70] sm:$0xff] 0.0
      %130 = vst [vmem:[#allocation3 + $0x78] sm:$0xff] 0.0
    $region53: #{tpu_custom_call.1} parent=1 // pred_fallthru
      _
    %v131 = vld [vmem:[#allocation4] sm:$0xf]
    %v132 = vld [vmem:[#allocation4 + $0x4] sm:$0xf]
    %v133 = vld [vmem:[#allocation4 + $0x8] sm:$0xf]
    %v134 = vld [vmem:[#allocation4 + $0xc] sm:$0xf]
    %v135 = vld [vmem:[#allocation4 + $0x10] sm:$0xf]
    %v136 = vld [vmem:[#allocation4 + $0x14] sm:$0xf]
    %v137 = vld [vmem:[#allocation4 + $0x18] sm:$0xf]
    %v138 = vld [vmem:[#allocation4 + $0x1c] sm:$0xf]
    %v139 = vld [vmem:[#allocation4 + $0x20] sm:$0xf]
    %v140 = vld [vmem:[#allocation4 + $0x24] sm:$0xf]
    %v141 = vld [vmem:[#allocation4 + $0x28] sm:$0xf]
    %v142 = vld [vmem:[#allocation4 + $0x2c] sm:$0xf]
    %v143 = vld [vmem:[#allocation4 + $0x30] sm:$0xf]
    %v144 = vld [vmem:[#allocation4 + $0x34] sm:$0xf]
    %v145 = vld [vmem:[#allocation4 + $0x38] sm:$0xf]
    %v146 = vld [vmem:[#allocation4 + $0x3c] sm:$0xf]
    %v147 = vunpack.c.l.bf16 %v131
    %v148 = vunpack.c.l.bf16 %v132
    %v149 = vunpack.c.l.bf16 %v133
    %v150 = vunpack.c.l.bf16 %v134
    %v151 = vunpack.c.l.bf16 %v135
    %v152 = vunpack.c.l.bf16 %v136
    %v153 = vunpack.c.l.bf16 %v137
    %v154 = vunpack.c.l.bf16 %v138
    %v155 = vunpack.c.l.bf16 %v139
    %v156 = vunpack.c.l.bf16 %v140
    %v157 = vunpack.c.l.bf16 %v141
    %v158 = vunpack.c.l.bf16 %v142
    %v159 = vunpack.c.l.bf16 %v143
    %v160 = vunpack.c.l.bf16 %v144
    %v161 = vunpack.c.l.bf16 %v145
    %v162 = vunpack.c.l.bf16 %v146
    %v163 = vld [vmem:[#allocation3] sm:$0xff]
    %v164 = vld [vmem:[#allocation3 + $0x8] sm:$0xff]
    %v165 = vld [vmem:[#allocation3 + $0x10] sm:$0xff]
    %v166 = vld [vmem:[#allocation3 + $0x18] sm:$0xff]
    %v167 = vld [vmem:[#allocation3 + $0x20] sm:$0xff]
    %v168 = vld [vmem:[#allocation3 + $0x28] sm:$0xff]
    %v169 = vld [vmem:[#allocation3 + $0x30] sm:$0xff]
    %v170 = vld [vmem:[#allocation3 + $0x38] sm:$0xff]
    %v171 = vld [vmem:[#allocation3 + $0x40] sm:$0xff]
    %v172 = vld [vmem:[#allocation3 + $0x48] sm:$0xff]
    %v173 = vld [vmem:[#allocation3 + $0x50] sm:$0xff]
    %v174 = vld [vmem:[#allocation3 + $0x58] sm:$0xff]
    %v175 = vld [vmem:[#allocation3 + $0x60] sm:$0xff]
    %v176 = vld [vmem:[#allocation3 + $0x68] sm:$0xff]
    %v177 = vld [vmem:[#allocation3 + $0x70] sm:$0xff]
    %v178 = vld [vmem:[#allocation3 + $0x78] sm:$0xff]
    %179 = vmatprep.subr.mxu0 0.0
    %180 = vmatpush1.msra.mxu0 1.0
    %181 = vmatprep.subr.mxu0 0.0
    %182 = vmatpush1.msra.mxu0 1.0
    %183 = vmatprep.subr.mxu0 0.0
    %184 = vmatpush1.msra.mxu0 1.0
    %185 = vmatprep.subr.mxu0 0.0
    %186 = vmatpush1.msra.mxu0 1.0
    %187 = vmatprep.subr.mxu0 0.0
    %188 = vmatpush1.msra.mxu0 1.0
    %189 = vmatprep.subr.mxu0 0.0
    %190 = vmatpush1.msra.mxu0 1.0
    %191 = vmatprep.subr.mxu0 0.0
    %192 = vmatpush1.msra.mxu0 1.0
    %193 = vmatprep.subr.mxu0 0.0
    %194 = vmatpush1.msra.mxu0 1.0
    %195 = vmatprep.subr.mxu0 0.0
    %196 = vmatpush1.msra.mxu0 1.0
    %197 = vmatprep.subr.mxu0 0.0
    %198 = vmatpush1.msra.mxu0 1.0
    %199 = vmatprep.subr.mxu0 0.0
    %200 = vmatpush1.msra.mxu0 1.0
    %201 = vmatprep.subr.mxu0 0.0
    %202 = vmatpush1.msra.mxu0 1.0
    %203 = vmatprep.subr.mxu0 0.0
    %204 = vmatpush1.msra.mxu0 1.0
    %205 = vmatprep.subr.mxu0 0.0
    %206 = vmatpush1.msra.mxu0 1.0
    %207 = vmatprep.subr.mxu0 0.0
    %208 = vmatpush1.msra.mxu0 1.0
    %209 = vmatprep.subr.mxu0 0.0
    %210 = vmatpush1.msra.mxu0 1.0
    %211 = vmatprep.subr.mxu0 0.0
    %212 = vmatpush1.msra.mxu0 0.0
    %213 = vmatprep.subr.mxu0 0.0
    %214 = vmatpush1.msra.mxu0 0.0
    %215 = vmatprep.subr.mxu0 0.0
    %216 = vmatpush1.msra.mxu0 0.0
    %217 = vmatprep.subr.mxu0 0.0
    %218 = vmatpush1.msra.mxu0 0.0
    %219 = vmatprep.subr.mxu0 0.0
    %220 = vmatpush1.msra.mxu0 0.0
    %221 = vmatprep.subr.mxu0 0.0
    %222 = vmatpush1.msra.mxu0 0.0
    %223 = vmatprep.subr.mxu0 0.0
    %224 = vmatpush1.msra.mxu0 0.0
    %225 = vmatprep.subr.mxu0 0.0
    %226 = vmatpush1.msra.mxu0 0.0
    %227 = vmatprep.subr.mxu0 0.0
    %228 = vmatpush1.msra.mxu0 0.0
    %229 = vmatprep.subr.mxu0 0.0
    %230 = vmatpush1.msra.mxu0 0.0
    %231 = vmatprep.subr.mxu0 0.0
    %232 = vmatpush1.msra.mxu0 0.0
    %233 = vmatprep.subr.mxu0 0.0
    %234 = vmatpush1.msra.mxu0 0.0
    %235 = vmatprep.subr.mxu0 0.0
    %236 = vmatpush1.msra.mxu0 0.0
    %237 = vmatprep.subr.mxu0 0.0
    %238 = vmatpush1.msra.mxu0 0.0
    %239 = vmatprep.subr.mxu0 0.0
    %240 = vmatpush1.msra.mxu0 0.0
    %241 = vmatprep.subr.mxu0 0.0
    %242 = vmatpush1.msra.mxu0 0.0
    %243 = vmatprep.mubr.f32.mxu0 0.0
    %244 = vmatmul.mubr.f32.gmra.mrb[0].mxu0 %v147
    %v245 = vpop.f32.mrb[0].mxu0
    %v246 = vadd.f32 0.0, %v245
    %v247 = vpop.f32.mrb[0].mxu0
    %248 = vmatprep.mubr.f32.mxu0 0.0
    %249 = vmatmul.mubr.f32.gmra.mrb[0].mxu0 %v148
    %v250 = vpop.f32.mrb[0].mxu0
    %v251 = vadd.f32 0.0, %v250
    %v252 = vpop.f32.mrb[0].mxu0
    %253 = vmatprep.mubr.f32.mxu0 0.0
    %254 = vmatmul.mubr.f32.gmra.mrb[0].mxu0 %v149
    %v255 = vpop.f32.mrb[0].mxu0
    %v256 = vadd.f32 0.0, %v255
    %v257 = vpop.f32.mrb[0].mxu0
    %258 = vmatprep.mubr.f32.mxu0 0.0
    %259 = vmatmul.mubr.f32.gmra.mrb[0].mxu0 %v150
    %v260 = vpop.f32.mrb[0].mxu0
    %v261 = vadd.f32 0.0, %v260
    %v262 = vpop.f32.mrb[0].mxu0
    %263 = vmatprep.mubr.f32.mxu0 0.0
    %264 = vmatmul.mubr.f32.gmra.mrb[0].mxu0 %v151
    %v265 = vpop.f32.mrb[0].mxu0
    %v266 = vadd.f32 0.0, %v265
    %v267 = vpop.f32.mrb[0].mxu0
    %268 = vmatprep.mubr.f32.mxu0 0.0
    %269 = vmatmul.mubr.f32.gmra.mrb[0].mxu0 %v152
    %v270 = vpop.f32.mrb[0].mxu0
    %v271 = vadd.f32 0.0, %v270
    %v272 = vpop.f32.mrb[0].mxu0
    %273 = vmatprep.mubr.f32.mxu0 0.0
    %274 = vmatmul.mubr.f32.gmra.mrb[0].mxu0 %v153
    %v275 = vpop.f32.mrb[0].mxu0
    %v276 = vadd.f32 0.0, %v275
    %v277 = vpop.f32.mrb[0].mxu0
    %278 = vmatprep.mubr.f32.mxu0 0.0
    %279 = vmatmul.mubr.f32.gmra.mrb[0].mxu0 %v154
    %v280 = vpop.f32.mrb[0].mxu0
    %v281 = vadd.f32 0.0, %v280
    %v282 = vpop.f32.mrb[0].mxu0
    %283 = vmatprep.mubr.f32.mxu0 0.0
    %284 = vmatmul.mubr.f32.gmra.mrb[0].mxu0 %v155
    %v285 = vpop.f32.mrb[0].mxu0
    %v286 = vadd.f32 0.0, %v285
    %v287 = vpop.f32.mrb[0].mxu0
    %288 = vmatprep.mubr.f32.mxu0 0.0
    %289 = vmatmul.mubr.f32.gmra.mrb[0].mxu0 %v156
    %v290 = vpop.f32.mrb[0].mxu0
    %v291 = vadd.f32 0.0, %v290
    %v292 = vpop.f32.mrb[0].mxu0
    %293 = vmatprep.mubr.f32.mxu0 0.0
    %294 = vmatmul.mubr.f32.gmra.mrb[0].mxu0 %v157
    %v295 = vpop.f32.mrb[0].mxu0
    %v296 = vadd.f32 0.0, %v295
    %v297 = vpop.f32.mrb[0].mxu0
    %298 = vmatprep.mubr.f32.mxu0 0.0
    %299 = vmatmul.mubr.f32.gmra.mrb[0].mxu0 %v158
    %v300 = vpop.f32.mrb[0].mxu0
    %v301 = vadd.f32 0.0, %v300
    %v302 = vpop.f32.mrb[0].mxu0
    %303 = vmatprep.mubr.f32.mxu0 0.0
    %304 = vmatmul.mubr.f32.gmra.mrb[0].mxu0 %v159
    %v305 = vpop.f32.mrb[0].mxu0
    %v306 = vadd.f32 0.0, %v305
    %v307 = vpop.f32.mrb[0].mxu0
    %308 = vmatprep.mubr.f32.mxu0 0.0
    %309 = vmatmul.mubr.f32.gmra.mrb[0].mxu0 %v160
    %v310 = vpop.f32.mrb[0].mxu0
    %v311 = vadd.f32 0.0, %v310
    %v312 = vpop.f32.mrb[0].mxu0
    %313 = vmatprep.mubr.f32.mxu0 0.0
    %314 = vmatmul.mubr.f32.gmra.mrb[0].mxu0 %v161
    %v315 = vpop.f32.mrb[0].mxu0
    %v316 = vadd.f32 0.0, %v315
    %v317 = vpop.f32.mrb[0].mxu0
    %318 = vmatprep.mubr.f32.mxu0 0.0
    %319 = vmatmul.mubr.f32.gmra.mrb[0].mxu0 %v162
    %v320 = vpop.f32.mrb[0].mxu0
    %v321 = vadd.f32 0.0, %v320
    %v322 = vpop.f32.mrb[0].mxu0
    %323 = vdwg.mxu0
    %v324 = vadd.f32 %v163, %v246
    %v325 = vadd.f32 %v164, %v251
    %v326 = vadd.f32 %v165, %v256
    %v327 = vadd.f32 %v166, %v261
    %v328 = vadd.f32 %v167, %v266
    %v329 = vadd.f32 %v168, %v271
    %v330 = vadd.f32 %v169, %v276
    %v331 = vadd.f32 %v170, %v281
    %v332 = vadd.f32 %v171, %v286
    %v333 = vadd.f32 %v172, %v291
    %v334 = vadd.f32 %v173, %v296
    %v335 = vadd.f32 %v174, %v301
    %v336 = vadd.f32 %v175, %v306
    %v337 = vadd.f32 %v176, %v311
    %v338 = vadd.f32 %v177, %v316
    %v339 = vadd.f32 %v178, %v321
    %340 = vst [vmem:[#allocation3] sm:$0xff] %v324
    %341 = vst [vmem:[#allocation3 + $0x8] sm:$0xff] %v325
    %342 = vst [vmem:[#allocation3 + $0x10] sm:$0xff] %v326
    %343 = vst [vmem:[#allocation3 + $0x18] sm:$0xff] %v327
    %344 = vst [vmem:[#allocation3 + $0x20] sm:$0xff] %v328
    %345 = vst [vmem:[#allocation3 + $0x28] sm:$0xff] %v329
    %346 = vst [vmem:[#allocation3 + $0x30] sm:$0xff] %v330
    %347 = vst [vmem:[#allocation3 + $0x38] sm:$0xff] %v331
    %348 = vst [vmem:[#allocation3 + $0x40] sm:$0xff] %v332
    %349 = vst [vmem:[#allocation3 + $0x48] sm:$0xff] %v333
    %350 = vst [vmem:[#allocation3 + $0x50] sm:$0xff] %v334
    %351 = vst [vmem:[#allocation3 + $0x58] sm:$0xff] %v335
    %352 = vst [vmem:[#allocation3 + $0x60] sm:$0xff] %v336
    %353 = vst [vmem:[#allocation3 + $0x68] sm:$0xff] %v337
    %354 = vst [vmem:[#allocation3 + $0x70] sm:$0xff] %v338
    %355 = vst [vmem:[#allocation3 + $0x78] sm:$0xff] %v339
    %v356 = vld [vmem:[#allocation2] sm:$0xff]
    %v357 = vld [vmem:[#allocation2 + $0x8] sm:$0xff]
    %v358 = vld [vmem:[#allocation2 + $0x10] sm:$0xff]
    %v359 = vld [vmem:[#allocation2 + $0x18] sm:$0xff]
    %v360 = vld [vmem:[#allocation2 + $0x20] sm:$0xff]
    %v361 = vld [vmem:[#allocation2 + $0x28] sm:$0xff]
    %v362 = vld [vmem:[#allocation2 + $0x30] sm:$0xff]
    %v363 = vld [vmem:[#allocation2 + $0x38] sm:$0xff]
    %v364 = vld [vmem:[#allocation2 + $0x40] sm:$0xff]
    %v365 = vld [vmem:[#allocation2 + $0x48] sm:$0xff]
    %v366 = vld [vmem:[#allocation2 + $0x50] sm:$0xff]
    %v367 = vld [vmem:[#allocation2 + $0x58] sm:$0xff]
    %v368 = vld [vmem:[#allocation2 + $0x60] sm:$0xff]
    %v369 = vld [vmem:[#allocation2 + $0x68] sm:$0xff]
    %v370 = vld [vmem:[#allocation2 + $0x70] sm:$0xff]
    %v371 = vld [vmem:[#allocation2 + $0x78] sm:$0xff]
    %v372 = vld [vmem:[#allocation7] sm:$0xff]
    %v373 = vld [vmem:[#allocation7 + $0x8] sm:$0xff]
    %v374 = vld [vmem:[#allocation7 + $0x10] sm:$0xff]
    %v375 = vld [vmem:[#allocation7 + $0x18] sm:$0xff]
    %v376 = vld [vmem:[#allocation7 + $0x20] sm:$0xff]
    %v377 = vld [vmem:[#allocation7 + $0x28] sm:$0xff]
    %v378 = vld [vmem:[#allocation7 + $0x30] sm:$0xff]
    %v379 = vld [vmem:[#allocation7 + $0x38] sm:$0xff]
    %v380 = vld [vmem:[#allocation7 + $0x40] sm:$0xff]
    %v381 = vld [vmem:[#allocation7 + $0x48] sm:$0xff]
    %v382 = vld [vmem:[#allocation7 + $0x50] sm:$0xff]
    %v383 = vld [vmem:[#allocation7 + $0x58] sm:$0xff]
    %v384 = vld [vmem:[#allocation7 + $0x60] sm:$0xff]
    %v385 = vld [vmem:[#allocation7 + $0x68] sm:$0xff]
    %v386 = vld [vmem:[#allocation7 + $0x70] sm:$0xff]
    %v387 = vld [vmem:[#allocation7 + $0x78] sm:$0xff]
    %388 = vmatprep.subr.mxu0 0.0
    %389 = vmatpush1.msra.mxu0 %v372
    %390 = vmatprep.subr.mxu0 0.0
    %391 = vmatpush1.msra.mxu0 %v373
    %392 = vmatprep.subr.mxu0 0.0
    %393 = vmatpush1.msra.mxu0 %v374
    %394 = vmatprep.subr.mxu0 0.0
    %395 = vmatpush1.msra.mxu0 %v375
    %396 = vmatprep.subr.mxu0 0.0
    %397 = vmatpush1.msra.mxu0 %v376
    %398 = vmatprep.subr.mxu0 0.0
    %399 = vmatpush1.msra.mxu0 %v377
    %400 = vmatprep.subr.mxu0 0.0
    %401 = vmatpush1.msra.mxu0 %v378
    %402 = vmatprep.subr.mxu0 0.0
    %403 = vmatpush1.msra.mxu0 %v379
    %404 = vmatprep.subr.mxu0 0.0
    %405 = vmatpush1.msra.mxu0 %v380
    %406 = vmatprep.subr.mxu0 0.0
    %407 = vmatpush1.msra.mxu0 %v381
    %408 = vmatprep.subr.mxu0 0.0
    %409 = vmatpush1.msra.mxu0 %v382
    %410 = vmatprep.subr.mxu0 0.0
    %411 = vmatpush1.msra.mxu0 %v383
    %412 = vmatprep.subr.mxu0 0.0
    %413 = vmatpush1.msra.mxu0 %v384
    %414 = vmatprep.subr.mxu0 0.0
    %415 = vmatpush1.msra.mxu0 %v385
    %416 = vmatprep.subr.mxu0 0.0
    %417 = vmatpush1.msra.mxu0 %v386
    %418 = vmatprep.subr.mxu0 0.0
    %419 = vmatpush1.msra.mxu0 %v387
    %420 = vmatprep.subr.mxu0 0.0
    %421 = vmatpush1.msra.mxu0 0.0
    %422 = vmatprep.subr.mxu0 0.0
    %423 = vmatpush1.msra.mxu0 0.0
    %424 = vmatprep.subr.mxu0 0.0
    %425 = vmatpush1.msra.mxu0 0.0
    %426 = vmatprep.subr.mxu0 0.0
    %427 = vmatpush1.msra.mxu0 0.0
    %428 = vmatprep.subr.mxu0 0.0
    %429 = vmatpush1.msra.mxu0 0.0
    %430 = vmatprep.subr.mxu0 0.0
    %431 = vmatpush1.msra.mxu0 0.0
    %432 = vmatprep.subr.mxu0 0.0
    %433 = vmatpush1.msra.mxu0 0.0
    %434 = vmatprep.subr.mxu0 0.0
    %435 = vmatpush1.msra.mxu0 0.0
    %436 = vmatprep.subr.mxu0 0.0
    %437 = vmatpush1.msra.mxu0 0.0
    %438 = vmatprep.subr.mxu0 0.0
    %439 = vmatpush1.msra.mxu0 0.0
    %440 = vmatprep.subr.mxu0 0.0
    %441 = vmatpush1.msra.mxu0 0.0
    %442 = vmatprep.subr.mxu0 0.0
    %443 = vmatpush1.msra.mxu0 0.0
    %444 = vmatprep.subr.mxu0 0.0
    %445 = vmatpush1.msra.mxu0 0.0
    %446 = vmatprep.subr.mxu0 0.0
    %447 = vmatpush1.msra.mxu0 0.0
    %448 = vmatprep.subr.mxu0 0.0
    %449 = vmatpush1.msra.mxu0 0.0
    %450 = vmatprep.subr.mxu0 0.0
    %451 = vmatpush1.msra.mxu0 0.0
    %452 = vmatprep.mubr.f32.mxu0 0.0
    %453 = vmatmul.mubr.f32.gmra.mrb[0].mxu0 %v147
    %v454 = vpop.f32.mrb[0].mxu0
    %v455 = vadd.f32 0.0, %v454
    %v456 = vpop.f32.mrb[0].mxu0
    %457 = vmatprep.mubr.f32.mxu0 0.0
    %458 = vmatmul.mubr.f32.gmra.mrb[0].mxu0 %v148
    %v459 = vpop.f32.mrb[0].mxu0
    %v460 = vadd.f32 0.0, %v459
    %v461 = vpop.f32.mrb[0].mxu0
    %462 = vmatprep.mubr.f32.mxu0 0.0
    %463 = vmatmul.mubr.f32.gmra.mrb[0].mxu0 %v149
    %v464 = vpop.f32.mrb[0].mxu0
    %v465 = vadd.f32 0.0, %v464
    %v466 = vpop.f32.mrb[0].mxu0
    %467 = vmatprep.mubr.f32.mxu0 0.0
    %468 = vmatmul.mubr.f32.gmra.mrb[0].mxu0 %v150
    %v469 = vpop.f32.mrb[0].mxu0
    %v470 = vadd.f32 0.0, %v469
    %v471 = vpop.f32.mrb[0].mxu0
    %472 = vmatprep.mubr.f32.mxu0 0.0
    %473 = vmatmul.mubr.f32.gmra.mrb[0].mxu0 %v151
    %v474 = vpop.f32.mrb[0].mxu0
    %v475 = vadd.f32 0.0, %v474
    %v476 = vpop.f32.mrb[0].mxu0
    %477 = vmatprep.mubr.f32.mxu0 0.0
    %478 = vmatmul.mubr.f32.gmra.mrb[0].mxu0 %v152
    %v479 = vpop.f32.mrb[0].mxu0
    %v480 = vadd.f32 0.0, %v479
    %v481 = vpop.f32.mrb[0].mxu0
    %482 = vmatprep.mubr.f32.mxu0 0.0
    %483 = vmatmul.mubr.f32.gmra.mrb[0].mxu0 %v153
    %v484 = vpop.f32.mrb[0].mxu0
    %v485 = vadd.f32 0.0, %v484
    %v486 = vpop.f32.mrb[0].mxu0
    %487 = vmatprep.mubr.f32.mxu0 0.0
    %488 = vmatmul.mubr.f32.gmra.mrb[0].mxu0 %v154
    %v489 = vpop.f32.mrb[0].mxu0
    %v490 = vadd.f32 0.0, %v489
    %v491 = vpop.f32.mrb[0].mxu0
    %492 = vmatprep.mubr.f32.mxu0 0.0
    %493 = vmatmul.mubr.f32.gmra.mrb[0].mxu0 %v155
    %v494 = vpop.f32.mrb[0].mxu0
    %v495 = vadd.f32 0.0, %v494
    %v496 = vpop.f32.mrb[0].mxu0
    %497 = vmatprep.mubr.f32.mxu0 0.0
    %498 = vmatmul.mubr.f32.gmra.mrb[0].mxu0 %v156
    %v499 = vpop.f32.mrb[0].mxu0
    %v500 = vadd.f32 0.0, %v499
    %v501 = vpop.f32.mrb[0].mxu0
    %502 = vmatprep.mubr.f32.mxu0 0.0
    %503 = vmatmul.mubr.f32.gmra.mrb[0].mxu0 %v157
    %v504 = vpop.f32.mrb[0].mxu0
    %v505 = vadd.f32 0.0, %v504
    %v506 = vpop.f32.mrb[0].mxu0
    %507 = vmatprep.mubr.f32.mxu0 0.0
    %508 = vmatmul.mubr.f32.gmra.mrb[0].mxu0 %v158
    %v509 = vpop.f32.mrb[0].mxu0
    %v510 = vadd.f32 0.0, %v509
    %v511 = vpop.f32.mrb[0].mxu0
    %512 = vmatprep.mubr.f32.mxu0 0.0
    %513 = vmatmul.mubr.f32.gmra.mrb[0].mxu0 %v159
    %v514 = vpop.f32.mrb[0].mxu0
    %v515 = vadd.f32 0.0, %v514
    %v516 = vpop.f32.mrb[0].mxu0
    %517 = vmatprep.mubr.f32.mxu0 0.0
    %518 = vmatmul.mubr.f32.gmra.mrb[0].mxu0 %v160
    %v519 = vpop.f32.mrb[0].mxu0
    %v520 = vadd.f32 0.0, %v519
    %v521 = vpop.f32.mrb[0].mxu0
    %522 = vmatprep.mubr.f32.mxu0 0.0
    %523 = vmatmul.mubr.f32.gmra.mrb[0].mxu0 %v161
    %v524 = vpop.f32.mrb[0].mxu0
    %v525 = vadd.f32 0.0, %v524
    %v526 = vpop.f32.mrb[0].mxu0
    %527 = vmatprep.mubr.f32.mxu0 0.0
    %528 = vmatmul.mubr.f32.gmra.mrb[0].mxu0 %v162
    %v529 = vpop.f32.mrb[0].mxu0
    %v530 = vadd.f32 0.0, %v529
    %v531 = vpop.f32.mrb[0].mxu0
    %532 = vdwg.mxu0
    %v533 = vadd.f32 %v356, %v455
    %v534 = vadd.f32 %v357, %v460
    %v535 = vadd.f32 %v358, %v465
    %v536 = vadd.f32 %v359, %v470
    %v537 = vadd.f32 %v360, %v475
    %v538 = vadd.f32 %v361, %v480
    %v539 = vadd.f32 %v362, %v485
    %v540 = vadd.f32 %v363, %v490
    %v541 = vadd.f32 %v364, %v495
    %v542 = vadd.f32 %v365, %v500
    %v543 = vadd.f32 %v366, %v505
    %v544 = vadd.f32 %v367, %v510
    %v545 = vadd.f32 %v368, %v515
    %v546 = vadd.f32 %v369, %v520
    %v547 = vadd.f32 %v370, %v525
    %v548 = vadd.f32 %v371, %v530
    %549 = vst [vmem:[#allocation2] sm:$0xff] %v533
    %550 = vst [vmem:[#allocation2 + $0x8] sm:$0xff] %v534
    %551 = vst [vmem:[#allocation2 + $0x10] sm:$0xff] %v535
    %552 = vst [vmem:[#allocation2 + $0x18] sm:$0xff] %v536
    %553 = vst [vmem:[#allocation2 + $0x20] sm:$0xff] %v537
    %554 = vst [vmem:[#allocation2 + $0x28] sm:$0xff] %v538
    %555 = vst [vmem:[#allocation2 + $0x30] sm:$0xff] %v539
    %556 = vst [vmem:[#allocation2 + $0x38] sm:$0xff] %v540
    %557 = vst [vmem:[#allocation2 + $0x40] sm:$0xff] %v541
    %558 = vst [vmem:[#allocation2 + $0x48] sm:$0xff] %v542
    %559 = vst [vmem:[#allocation2 + $0x50] sm:$0xff] %v543
    %560 = vst [vmem:[#allocation2 + $0x58] sm:$0xff] %v544
    %561 = vst [vmem:[#allocation2 + $0x60] sm:$0xff] %v545
    %562 = vst [vmem:[#allocation2 + $0x68] sm:$0xff] %v546
    %563 = vst [vmem:[#allocation2 + $0x70] sm:$0xff] %v547
    %564 = vst [vmem:[#allocation2 + $0x78] sm:$0xff] %v548
    // Predicated region
    $region54: #{tpu_custom_call.1} parent=1 // pred_check
      %p565 = pneg %p95
    $region55: #{tpu_custom_call.1} parent=1 // pred_check_branch
      %567 = sbr.rel (%p565) target = $region57
    $region56: #{tpu_custom_call.1} parent=1 // pred_region
      %v568 = vld [vmem:[#allocation3] sm:$0xff]
      %v569 = vld [vmem:[#allocation3 + $0x8] sm:$0xff]
      %v570 = vld [vmem:[#allocation3 + $0x10] sm:$0xff]
      %v571 = vld [vmem:[#allocation3 + $0x18] sm:$0xff]
      %v572 = vld [vmem:[#allocation3 + $0x20] sm:$0xff]
      %v573 = vld [vmem:[#allocation3 + $0x28] sm:$0xff]
      %v574 = vld [vmem:[#allocation3 + $0x30] sm:$0xff]
      %v575 = vld [vmem:[#allocation3 + $0x38] sm:$0xff]
      %v576 = vld [vmem:[#allocation3 + $0x40] sm:$0xff]
      %v577 = vld [vmem:[#allocation3 + $0x48] sm:$0xff]
      %v578 = vld [vmem:[#allocation3 + $0x50] sm:$0xff]
      %v579 = vld [vmem:[#allocation3 + $0x58] sm:$0xff]
      %v580 = vld [vmem:[#allocation3 + $0x60] sm:$0xff]
      %v581 = vld [vmem:[#allocation3 + $0x68] sm:$0xff]
      %v582 = vld [vmem:[#allocation3 + $0x70] sm:$0xff]
      %v583 = vld [vmem:[#allocation3 + $0x78] sm:$0xff]
      %v584 = vld [vmem:[#allocation2] sm:$0xff]
      %v585 = vld [vmem:[#allocation2 + $0x8] sm:$0xff]
      %v586 = vld [vmem:[#allocation2 + $0x10] sm:$0xff]
      %v587 = vld [vmem:[#allocation2 + $0x18] sm:$0xff]
      %v588 = vld [vmem:[#allocation2 + $0x20] sm:$0xff]
      %v589 = vld [vmem:[#allocation2 + $0x28] sm:$0xff]
      %v590 = vld [vmem:[#allocation2 + $0x30] sm:$0xff]
      %v591 = vld [vmem:[#allocation2 + $0x38] sm:$0xff]
      %v592 = vld [vmem:[#allocation2 + $0x40] sm:$0xff]
      %v593 = vld [vmem:[#allocation2 + $0x48] sm:$0xff]
      %v594 = vld [vmem:[#allocation2 + $0x50] sm:$0xff]
      %v595 = vld [vmem:[#allocation2 + $0x58] sm:$0xff]
      %v596 = vld [vmem:[#allocation2 + $0x60] sm:$0xff]
      %v597 = vld [vmem:[#allocation2 + $0x68] sm:$0xff]
      %v598 = vld [vmem:[#allocation2 + $0x70] sm:$0xff]
      %v599 = vld [vmem:[#allocation2 + $0x78] sm:$0xff]
      %vm600 = vcmp.gt.f32.partialorder %v568, 0.0
      %vm601 = vcmp.gt.f32.partialorder %v569, 0.0
      %vm602 = vcmp.gt.f32.partialorder %v570, 0.0
      %vm603 = vcmp.gt.f32.partialorder %v571, 0.0
      %vm604 = vcmp.gt.f32.partialorder %v572, 0.0
      %vm605 = vcmp.gt.f32.partialorder %v573, 0.0
      %vm606 = vcmp.gt.f32.partialorder %v574, 0.0
      %vm607 = vcmp.gt.f32.partialorder %v575, 0.0
      %vm608 = vcmp.gt.f32.partialorder %v576, 0.0
      %vm609 = vcmp.gt.f32.partialorder %v577, 0.0
      %vm610 = vcmp.gt.f32.partialorder %v578, 0.0
      %vm611 = vcmp.gt.f32.partialorder %v579, 0.0
      %vm612 = vcmp.gt.f32.partialorder %v580, 0.0
      %vm613 = vcmp.gt.f32.partialorder %v581, 0.0
      %vm614 = vcmp.gt.f32.partialorder %v582, 0.0
      %vm615 = vcmp.gt.f32.partialorder %v583, 0.0
      %v616 = vmax.f32 %v568, 1.0
      %v617 = vmax.f32 %v569, 1.0
      %v618 = vmax.f32 %v570, 1.0
      %v619 = vmax.f32 %v571, 1.0
      %v620 = vmax.f32 %v572, 1.0
      %v621 = vmax.f32 %v573, 1.0
      %v622 = vmax.f32 %v574, 1.0
      %v623 = vmax.f32 %v575, 1.0
      %v624 = vmax.f32 %v576, 1.0
      %v625 = vmax.f32 %v577, 1.0
      %v626 = vmax.f32 %v578, 1.0
      %v627 = vmax.f32 %v579, 1.0
      %v628 = vmax.f32 %v580, 1.0
      %v629 = vmax.f32 %v581, 1.0
      %v630 = vmax.f32 %v582, 1.0
      %v631 = vmax.f32 %v583, 1.0
      %633 = vset.pattern.permute.xlu0 0
      %634 = vperm.xlu0 %633, %v616
      %v635 = vpop.permute.xlu0 %634
      %638 = vset.pattern.permute.xlu0 0
      %639 = vperm.xlu0 %638, %v617
      %v640 = vpop.permute.xlu0 %639
      %643 = vset.pattern.permute.xlu0 0
      %644 = vperm.xlu0 %643, %v618
      %v645 = vpop.permute.xlu0 %644
      %648 = vset.pattern.permute.xlu0 0
      %649 = vperm.xlu0 %648, %v619
      %v650 = vpop.permute.xlu0 %649
      %653 = vset.pattern.permute.xlu0 0
      %654 = vperm.xlu0 %653, %v620
      %v655 = vpop.permute.xlu0 %654
      %658 = vset.pattern.permute.xlu0 0
      %659 = vperm.xlu0 %658, %v621
      %v660 = vpop.permute.xlu0 %659
      %663 = vset.pattern.permute.xlu0 0
      %664 = vperm.xlu0 %663, %v622
      %v665 = vpop.permute.xlu0 %664
      %668 = vset.pattern.permute.xlu0 0
      %669 = vperm.xlu0 %668, %v623
      %v670 = vpop.permute.xlu0 %669
      %673 = vset.pattern.permute.xlu0 0
      %674 = vperm.xlu0 %673, %v624
      %v675 = vpop.permute.xlu0 %674
      %678 = vset.pattern.permute.xlu0 0
      %679 = vperm.xlu0 %678, %v625
      %v680 = vpop.permute.xlu0 %679
      %683 = vset.pattern.permute.xlu0 0
      %684 = vperm.xlu0 %683, %v626
      %v685 = vpop.permute.xlu0 %684
      %688 = vset.pattern.permute.xlu0 0
      %689 = vperm.xlu0 %688, %v627
      %v690 = vpop.permute.xlu0 %689
      %693 = vset.pattern.permute.xlu0 0
      %694 = vperm.xlu0 %693, %v628
      %v695 = vpop.permute.xlu0 %694
      %698 = vset.pattern.permute.xlu0 0
      %699 = vperm.xlu0 %698, %v629
      %v700 = vpop.permute.xlu0 %699
      %703 = vset.pattern.permute.xlu0 0
      %704 = vperm.xlu0 %703, %v630
      %v705 = vpop.permute.xlu0 %704
      %708 = vset.pattern.permute.xlu0 0
      %709 = vperm.xlu0 %708, %v631
      %v710 = vpop.permute.xlu0 %709
      %v712 = vrcp.pop %v635
      %v713 = vmul.f32 %v584, %v712
      %v714 = vrcp.pop %v640
      %v715 = vmul.f32 %v585, %v714
      %v716 = vrcp.pop %v645
      %v717 = vmul.f32 %v586, %v716
      %v718 = vrcp.pop %v650
      %v719 = vmul.f32 %v587, %v718
      %v720 = vrcp.pop %v655
      %v721 = vmul.f32 %v588, %v720
      %v722 = vrcp.pop %v660
      %v723 = vmul.f32 %v589, %v722
      %v724 = vrcp.pop %v665
      %v725 = vmul.f32 %v590, %v724
      %v726 = vrcp.pop %v670
      %v727 = vmul.f32 %v591, %v726
      %v728 = vrcp.pop %v675
      %v729 = vmul.f32 %v592, %v728
      %v730 = vrcp.pop %v680
      %v731 = vmul.f32 %v593, %v730
      %v732 = vrcp.pop %v685
      %v733 = vmul.f32 %v594, %v732
      %v734 = vrcp.pop %v690
      %v735 = vmul.f32 %v595, %v734
      %v736 = vrcp.pop %v695
      %v737 = vmul.f32 %v596, %v736
      %v738 = vrcp.pop %v700
      %v739 = vmul.f32 %v597, %v738
      %v740 = vrcp.pop %v705
      %v741 = vmul.f32 %v598, %v740
      %v742 = vrcp.pop %v710
      %v743 = vmul.f32 %v599, %v742
      %v744 = vsel %vm600, 1, 0
      %v745 = vsel %vm601, 1, 0
      %v746 = vsel %vm602, 1, 0
      %v747 = vsel %vm603, 1, 0
      %v748 = vsel %vm604, 1, 0
      %v749 = vsel %vm605, 1, 0
      %v750 = vsel %vm606, 1, 0
      %v751 = vsel %vm607, 1, 0
      %v752 = vsel %vm608, 1, 0
      %v753 = vsel %vm609, 1, 0
      %v754 = vsel %vm610, 1, 0
      %v755 = vsel %vm611, 1, 0
      %v756 = vsel %vm612, 1, 0
      %v757 = vsel %vm613, 1, 0
      %v758 = vsel %vm614, 1, 0
      %v759 = vsel %vm615, 1, 0
      %760 = vset.pattern.permute.xlu0 0
      %761 = vperm.xlu0 %760, %v744
      %v762 = vpop.permute.xlu0 %761
      %763 = vset.pattern.permute.xlu0 0
      %764 = vperm.xlu0 %763, %v745
      %v765 = vpop.permute.xlu0 %764
      %766 = vset.pattern.permute.xlu0 0
      %767 = vperm.xlu0 %766, %v746
      %v768 = vpop.permute.xlu0 %767
      %769 = vset.pattern.permute.xlu0 0
      %770 = vperm.xlu0 %769, %v747
      %v771 = vpop.permute.xlu0 %770
      %772 = vset.pattern.permute.xlu0 0
      %773 = vperm.xlu0 %772, %v748
      %v774 = vpop.permute.xlu0 %773
      %775 = vset.pattern.permute.xlu0 0
      %776 = vperm.xlu0 %775, %v749
      %v777 = vpop.permute.xlu0 %776
      %778 = vset.pattern.permute.xlu0 0
      %779 = vperm.xlu0 %778, %v750
      %v780 = vpop.permute.xlu0 %779
      %781 = vset.pattern.permute.xlu0 0
      %782 = vperm.xlu0 %781, %v751
      %v783 = vpop.permute.xlu0 %782
      %784 = vset.pattern.permute.xlu0 0
      %785 = vperm.xlu0 %784, %v752
      %v786 = vpop.permute.xlu0 %785
      %787 = vset.pattern.permute.xlu0 0
      %788 = vperm.xlu0 %787, %v753
      %v789 = vpop.permute.xlu0 %788
      %790 = vset.pattern.permute.xlu0 0
      %791 = vperm.xlu0 %790, %v754
      %v792 = vpop.permute.xlu0 %791
      %793 = vset.pattern.permute.xlu0 0
      %794 = vperm.xlu0 %793, %v755
      %v795 = vpop.permute.xlu0 %794
      %796 = vset.pattern.permute.xlu0 0
      %797 = vperm.xlu0 %796, %v756
      %v798 = vpop.permute.xlu0 %797
      %799 = vset.pattern.permute.xlu0 0
      %800 = vperm.xlu0 %799, %v757
      %v801 = vpop.permute.xlu0 %800
      %802 = vset.pattern.permute.xlu0 0
      %803 = vperm.xlu0 %802, %v758
      %v804 = vpop.permute.xlu0 %803
      %805 = vset.pattern.permute.xlu0 0
      %806 = vperm.xlu0 %805, %v759
      %v807 = vpop.permute.xlu0 %806
      %vm808 = vcmp.eq.s32.totalorder %v762, 1
      %vm809 = vcmp.eq.s32.totalorder %v765, 1
      %vm810 = vcmp.eq.s32.totalorder %v768, 1
      %vm811 = vcmp.eq.s32.totalorder %v771, 1
      %vm812 = vcmp.eq.s32.totalorder %v774, 1
      %vm813 = vcmp.eq.s32.totalorder %v777, 1
      %vm814 = vcmp.eq.s32.totalorder %v780, 1
      %vm815 = vcmp.eq.s32.totalorder %v783, 1
      %vm816 = vcmp.eq.s32.totalorder %v786, 1
      %vm817 = vcmp.eq.s32.totalorder %v789, 1
      %vm818 = vcmp.eq.s32.totalorder %v792, 1
      %vm819 = vcmp.eq.s32.totalorder %v795, 1
      %vm820 = vcmp.eq.s32.totalorder %v798, 1
      %vm821 = vcmp.eq.s32.totalorder %v801, 1
      %vm822 = vcmp.eq.s32.totalorder %v804, 1
      %vm823 = vcmp.eq.s32.totalorder %v807, 1
      %v824 = vsel %vm808, %v713, 0.0
      %v825 = vsel %vm809, %v715, 0.0
      %v826 = vsel %vm810, %v717, 0.0
      %v827 = vsel %vm811, %v719, 0.0
      %v828 = vsel %vm812, %v721, 0.0
      %v829 = vsel %vm813, %v723, 0.0
      %v830 = vsel %vm814, %v725, 0.0
      %v831 = vsel %vm815, %v727, 0.0
      %v832 = vsel %vm816, %v729, 0.0
      %v833 = vsel %vm817, %v731, 0.0
      %v834 = vsel %vm818, %v733, 0.0
      %v835 = vsel %vm819, %v735, 0.0
      %v836 = vsel %vm820, %v737, 0.0
      %v837 = vsel %vm821, %v739, 0.0
      %v838 = vsel %vm822, %v741, 0.0
      %v839 = vsel %vm823, %v743, 0.0
      %v840 = vld [vmem:[#allocation10] sm:$0xff]
      %v841 = vld [vmem:[#allocation10 + $0x8] sm:$0xff]
      %v842 = vld [vmem:[#allocation10 + $0x10] sm:$0xff]
      %v843 = vld [vmem:[#allocation10 + $0x18] sm:$0xff]
      %v844 = vld [vmem:[#allocation10 + $0x20] sm:$0xff]
      %v845 = vld [vmem:[#allocation10 + $0x28] sm:$0xff]
      %v846 = vld [vmem:[#allocation10 + $0x30] sm:$0xff]
      %v847 = vld [vmem:[#allocation10 + $0x38] sm:$0xff]
      %v848 = vld [vmem:[#allocation10 + $0x40] sm:$0xff]
      %v849 = vld [vmem:[#allocation10 + $0x48] sm:$0xff]
      %v850 = vld [vmem:[#allocation10 + $0x50] sm:$0xff]
      %v851 = vld [vmem:[#allocation10 + $0x58] sm:$0xff]
      %v852 = vld [vmem:[#allocation10 + $0x60] sm:$0xff]
      %v853 = vld [vmem:[#allocation10 + $0x68] sm:$0xff]
      %v854 = vld [vmem:[#allocation10 + $0x70] sm:$0xff]
      %v855 = vld [vmem:[#allocation10 + $0x78] sm:$0xff]
      %v856 = vld [vmem:[%s4] sm:$0x1]
      %v858 = vlaneseq
      %v859 = vshrl.u32 %v858, 7
      %v860 = vsub.s32 0, %v859
      %v861 = vrot.slane %v856, %v860
      %863 = vmatprep.subr.mxu0 0.0
      %864 = vmatpush1.msra.mxu0 %v840
      %865 = vmatprep.subr.mxu0 0.0
      %866 = vmatpush1.msra.mxu0 %v841
      %867 = vmatprep.subr.mxu0 0.0
      %868 = vmatpush1.msra.mxu0 %v842
      %869 = vmatprep.subr.mxu0 0.0
      %870 = vmatpush1.msra.mxu0 %v843
      %871 = vmatprep.subr.mxu0 0.0
      %872 = vmatpush1.msra.mxu0 %v844
      %873 = vmatprep.subr.mxu0 0.0
      %874 = vmatpush1.msra.mxu0 %v845
      %875 = vmatprep.subr.mxu0 0.0
      %876 = vmatpush1.msra.mxu0 %v846
      %877 = vmatprep.subr.mxu0 0.0
      %878 = vmatpush1.msra.mxu0 %v847
      %879 = vmatprep.subr.mxu0 0.0
      %880 = vmatpush1.msra.mxu0 %v848
      %881 = vmatprep.subr.mxu0 0.0
      %882 = vmatpush1.msra.mxu0 %v849
      %883 = vmatprep.subr.mxu0 0.0
      %884 = vmatpush1.msra.mxu0 %v850
      %885 = vmatprep.subr.mxu0 0.0
      %886 = vmatpush1.msra.mxu0 %v851
      %887 = vmatprep.subr.mxu0 0.0
      %888 = vmatpush1.msra.mxu0 %v852
      %889 = vmatprep.subr.mxu0 0.0
      %890 = vmatpush1.msra.mxu0 %v853
      %891 = vmatprep.subr.mxu0 0.0
      %892 = vmatpush1.msra.mxu0 %v854
      %893 = vmatprep.subr.mxu0 0.0
      %894 = vmatpush1.msra.mxu0 %v855
      %895 = vmatprep.subr.mxu0 0.0
      %896 = vmatpush1.msra.mxu0 0.0
      %897 = vmatprep.subr.mxu0 0.0
      %898 = vmatpush1.msra.mxu0 0.0
      %899 = vmatprep.subr.mxu0 0.0
      %900 = vmatpush1.msra.mxu0 0.0
      %901 = vmatprep.subr.mxu0 0.0
      %902 = vmatpush1.msra.mxu0 0.0
      %903 = vmatprep.subr.mxu0 0.0
      %904 = vmatpush1.msra.mxu0 0.0
      %905 = vmatprep.subr.mxu0 0.0
      %906 = vmatpush1.msra.mxu0 0.0
      %907 = vmatprep.subr.mxu0 0.0
      %908 = vmatpush1.msra.mxu0 0.0
      %909 = vmatprep.subr.mxu0 0.0
      %910 = vmatpush1.msra.mxu0 0.0
      %911 = vmatprep.subr.mxu0 0.0
      %912 = vmatpush1.msra.mxu0 0.0
      %913 = vmatprep.subr.mxu0 0.0
      %914 = vmatpush1.msra.mxu0 0.0
      %915 = vmatprep.subr.mxu0 0.0
      %916 = vmatpush1.msra.mxu0 0.0
      %917 = vmatprep.subr.mxu0 0.0
      %918 = vmatpush1.msra.mxu0 0.0
      %919 = vmatprep.subr.mxu0 0.0
      %920 = vmatpush1.msra.mxu0 0.0
      %921 = vmatprep.subr.mxu0 0.0
      %922 = vmatpush1.msra.mxu0 0.0
      %923 = vmatprep.subr.mxu0 0.0
      %924 = vmatpush1.msra.mxu0 0.0
      %925 = vmatprep.subr.mxu0 0.0
      %926 = vmatpush1.msra.mxu0 0.0
      %927 = vmatprep.mubr.f32.mxu0 0.0
      %928 = vmatmul.mubr.f32.gmra.mrb[0].mxu0 %v824
      %v929 = vpop.f32.mrb[0].mxu0
      %v930 = vadd.f32 %v861, %v929
      %v931 = vpop.f32.mrb[0].mxu0
      %932 = vmatprep.mubr.f32.mxu0 0.0
      %933 = vmatmul.mubr.f32.gmra.mrb[0].mxu0 %v825
      %v934 = vpop.f32.mrb[0].mxu0
      %v935 = vadd.f32 %v861, %v934
      %v936 = vpop.f32.mrb[0].mxu0
      %937 = vmatprep.mubr.f32.mxu0 0.0
      %938 = vmatmul.mubr.f32.gmra.mrb[0].mxu0 %v826
      %v939 = vpop.f32.mrb[0].mxu0
      %v940 = vadd.f32 %v861, %v939
      %v941 = vpop.f32.mrb[0].mxu0
      %942 = vmatprep.mubr.f32.mxu0 0.0
      %943 = vmatmul.mubr.f32.gmra.mrb[0].mxu0 %v827
      %v944 = vpop.f32.mrb[0].mxu0
      %v945 = vadd.f32 %v861, %v944
      %v946 = vpop.f32.mrb[0].mxu0
      %947 = vmatprep.mubr.f32.mxu0 0.0
      %948 = vmatmul.mubr.f32.gmra.mrb[0].mxu0 %v828
      %v949 = vpop.f32.mrb[0].mxu0
      %v950 = vadd.f32 %v861, %v949
      %v951 = vpop.f32.mrb[0].mxu0
      %952 = vmatprep.mubr.f32.mxu0 0.0
      %953 = vmatmul.mubr.f32.gmra.mrb[0].mxu0 %v829
      %v954 = vpop.f32.mrb[0].mxu0
      %v955 = vadd.f32 %v861, %v954
      %v956 = vpop.f32.mrb[0].mxu0
      %957 = vmatprep.mubr.f32.mxu0 0.0
      %958 = vmatmul.mubr.f32.gmra.mrb[0].mxu0 %v830
      %v959 = vpop.f32.mrb[0].mxu0
      %v960 = vadd.f32 %v861, %v959
      %v961 = vpop.f32.mrb[0].mxu0
      %962 = vmatprep.mubr.f32.mxu0 0.0
      %963 = vmatmul.mubr.f32.gmra.mrb[0].mxu0 %v831
      %v964 = vpop.f32.mrb[0].mxu0
      %v965 = vadd.f32 %v861, %v964
      %v966 = vpop.f32.mrb[0].mxu0
      %967 = vmatprep.mubr.f32.mxu0 0.0
      %968 = vmatmul.mubr.f32.gmra.mrb[0].mxu0 %v832
      %v969 = vpop.f32.mrb[0].mxu0
      %v970 = vadd.f32 %v861, %v969
      %v971 = vpop.f32.mrb[0].mxu0
      %972 = vmatprep.mubr.f32.mxu0 0.0
      %973 = vmatmul.mubr.f32.gmra.mrb[0].mxu0 %v833
      %v974 = vpop.f32.mrb[0].mxu0
      %v975 = vadd.f32 %v861, %v974
      %v976 = vpop.f32.mrb[0].mxu0
      %977 = vmatprep.mubr.f32.mxu0 0.0
      %978 = vmatmul.mubr.f32.gmra.mrb[0].mxu0 %v834
      %v979 = vpop.f32.mrb[0].mxu0
      %v980 = vadd.f32 %v861, %v979
      %v981 = vpop.f32.mrb[0].mxu0
      %982 = vmatprep.mubr.f32.mxu0 0.0
      %983 = vmatmul.mubr.f32.gmra.mrb[0].mxu0 %v835
      %v984 = vpop.f32.mrb[0].mxu0
      %v985 = vadd.f32 %v861, %v984
      %v986 = vpop.f32.mrb[0].mxu0
      %987 = vmatprep.mubr.f32.mxu0 0.0
      %988 = vmatmul.mubr.f32.gmra.mrb[0].mxu0 %v836
      %v989 = vpop.f32.mrb[0].mxu0
      %v990 = vadd.f32 %v861, %v989
      %v991 = vpop.f32.mrb[0].mxu0
      %992 = vmatprep.mubr.f32.mxu0 0.0
      %993 = vmatmul.mubr.f32.gmra.mrb[0].mxu0 %v837
      %v994 = vpop.f32.mrb[0].mxu0
      %v995 = vadd.f32 %v861, %v994
      %v996 = vpop.f32.mrb[0].mxu0
      %997 = vmatprep.mubr.f32.mxu0 0.0
      %998 = vmatmul.mubr.f32.gmra.mrb[0].mxu0 %v838
      %v999 = vpop.f32.mrb[0].mxu0
      %v1000 = vadd.f32 %v861, %v999
      %v1001 = vpop.f32.mrb[0].mxu0
      %1002 = vmatprep.mubr.f32.mxu0 0.0
      %1003 = vmatmul.mubr.f32.gmra.mrb[0].mxu0 %v839
      %v1004 = vpop.f32.mrb[0].mxu0
      %v1005 = vadd.f32 %v861, %v1004
      %v1006 = vpop.f32.mrb[0].mxu0
      %1007 = vdwg.mxu0
      %vm1008 = vcmp.gt.f32.partialorder %v930, 0.0
      %vm1009 = vcmp.gt.f32.partialorder %v935, 0.0
      %vm1010 = vcmp.gt.f32.partialorder %v940, 0.0
      %vm1011 = vcmp.gt.f32.partialorder %v945, 0.0
      %vm1012 = vcmp.gt.f32.partialorder %v950, 0.0
      %vm1013 = vcmp.gt.f32.partialorder %v955, 0.0
      %vm1014 = vcmp.gt.f32.partialorder %v960, 0.0
      %vm1015 = vcmp.gt.f32.partialorder %v965, 0.0
      %vm1016 = vcmp.gt.f32.partialorder %v970, 0.0
      %vm1017 = vcmp.gt.f32.partialorder %v975, 0.0
      %vm1018 = vcmp.gt.f32.partialorder %v980, 0.0
      %vm1019 = vcmp.gt.f32.partialorder %v985, 0.0
      %vm1020 = vcmp.gt.f32.partialorder %v990, 0.0
      %vm1021 = vcmp.gt.f32.partialorder %v995, 0.0
      %vm1022 = vcmp.gt.f32.partialorder %v1000, 0.0
      %vm1023 = vcmp.gt.f32.partialorder %v1005, 0.0
      %v1024 = vmin.f32 %v930, 0.0
      %v1025 = vmin.f32 %v935, 0.0
      %v1026 = vmin.f32 %v940, 0.0
      %v1027 = vmin.f32 %v945, 0.0
      %v1028 = vmin.f32 %v950, 0.0
      %v1029 = vmin.f32 %v955, 0.0
      %v1030 = vmin.f32 %v960, 0.0
      %v1031 = vmin.f32 %v965, 0.0
      %v1032 = vmin.f32 %v970, 0.0
      %v1033 = vmin.f32 %v975, 0.0
      %v1034 = vmin.f32 %v980, 0.0
      %v1035 = vmin.f32 %v985, 0.0
      %v1036 = vmin.f32 %v990, 0.0
      %v1037 = vmin.f32 %v995, 0.0
      %v1038 = vmin.f32 %v1000, 0.0
      %v1039 = vmin.f32 %v1005, 0.0
      %v1040 = vmul.f32 %v1024, 1.442695
      %v1041 = vpow.pop %v1040
      %v1042 = vmul.f32 %v1025, 1.442695
      %v1043 = vpow.pop %v1042
      %v1044 = vmul.f32 %v1026, 1.442695
      %v1045 = vpow.pop %v1044
      %v1046 = vmul.f32 %v1027, 1.442695
      %v1047 = vpow.pop %v1046
      %v1048 = vmul.f32 %v1028, 1.442695
      %v1049 = vpow.pop %v1048
      %v1050 = vmul.f32 %v1029, 1.442695
      %v1051 = vpow.pop %v1050
      %v1052 = vmul.f32 %v1030, 1.442695
      %v1053 = vpow.pop %v1052
      %v1054 = vmul.f32 %v1031, 1.442695
      %v1055 = vpow.pop %v1054
      %v1056 = vmul.f32 %v1032, 1.442695
      %v1057 = vpow.pop %v1056
      %v1058 = vmul.f32 %v1033, 1.442695
      %v1059 = vpow.pop %v1058
      %v1060 = vmul.f32 %v1034, 1.442695
      %v1061 = vpow.pop %v1060
      %v1062 = vmul.f32 %v1035, 1.442695
      %v1063 = vpow.pop %v1062
      %v1064 = vmul.f32 %v1036, 1.442695
      %v1065 = vpow.pop %v1064
      %v1066 = vmul.f32 %v1037, 1.442695
      %v1067 = vpow.pop %v1066
      %v1068 = vmul.f32 %v1038, 1.442695
      %v1069 = vpow.pop %v1068
      %v1070 = vmul.f32 %v1039, 1.442695
      %v1071 = vpow.pop %v1070
      %v1072 = vsub.f32 %v1041, 1.0
      %v1073 = vsub.f32 %v1043, 1.0
      %v1074 = vsub.f32 %v1045, 1.0
      %v1075 = vsub.f32 %v1047, 1.0
      %v1076 = vsub.f32 %v1049, 1.0
      %v1077 = vsub.f32 %v1051, 1.0
      %v1078 = vsub.f32 %v1053, 1.0
      %v1079 = vsub.f32 %v1055, 1.0
      %v1080 = vsub.f32 %v1057, 1.0
      %v1081 = vsub.f32 %v1059, 1.0
      %v1082 = vsub.f32 %v1061, 1.0
      %v1083 = vsub.f32 %v1063, 1.0
      %v1084 = vsub.f32 %v1065, 1.0
      %v1085 = vsub.f32 %v1067, 1.0
      %v1086 = vsub.f32 %v1069, 1.0
      %v1087 = vsub.f32 %v1071, 1.0
      %v1088 = vsel %vm1008, %v930, %v1072
      %v1089 = vsel %vm1009, %v935, %v1073
      %v1090 = vsel %vm1010, %v940, %v1074
      %v1091 = vsel %vm1011, %v945, %v1075
      %v1092 = vsel %vm1012, %v950, %v1076
      %v1093 = vsel %vm1013, %v955, %v1077
      %v1094 = vsel %vm1014, %v960, %v1078
      %v1095 = vsel %vm1015, %v965, %v1079
      %v1096 = vsel %vm1016, %v970, %v1080
      %v1097 = vsel %vm1017, %v975, %v1081
      %v1098 = vsel %vm1018, %v980, %v1082
      %v1099 = vsel %vm1019, %v985, %v1083
      %v1100 = vsel %vm1020, %v990, %v1084
      %v1101 = vsel %vm1021, %v995, %v1085
      %v1102 = vsel %vm1022, %v1000, %v1086
      %v1103 = vsel %vm1023, %v1005, %v1087
      %1104 = vst [vmem:[#allocation13] sm:$0xff] %v1088
      %1105 = vst [vmem:[#allocation13 + $0x8] sm:$0xff] %v1089
      %1106 = vst [vmem:[#allocation13 + $0x10] sm:$0xff] %v1090
      %1107 = vst [vmem:[#allocation13 + $0x18] sm:$0xff] %v1091
      %1108 = vst [vmem:[#allocation13 + $0x20] sm:$0xff] %v1092
      %1109 = vst [vmem:[#allocation13 + $0x28] sm:$0xff] %v1093
      %1110 = vst [vmem:[#allocation13 + $0x30] sm:$0xff] %v1094
      %1111 = vst [vmem:[#allocation13 + $0x38] sm:$0xff] %v1095
      %1112 = vst [vmem:[#allocation13 + $0x40] sm:$0xff] %v1096
      %1113 = vst [vmem:[#allocation13 + $0x48] sm:$0xff] %v1097
      %1114 = vst [vmem:[#allocation13 + $0x50] sm:$0xff] %v1098
      %1115 = vst [vmem:[#allocation13 + $0x58] sm:$0xff] %v1099
      %1116 = vst [vmem:[#allocation13 + $0x60] sm:$0xff] %v1100
      %1117 = vst [vmem:[#allocation13 + $0x68] sm:$0xff] %v1101
      %1118 = vst [vmem:[#allocation13 + $0x70] sm:$0xff] %v1102
      %1119 = vst [vmem:[#allocation13 + $0x78] sm:$0xff] %v1103
    $region57: #{tpu_custom_call.1} parent=1 // pred_fallthru
      _
    // Predicated region
    $region58: #{tpu_custom_call.1} parent=1 // pred_check
      _
    $region59: #{tpu_custom_call.1} parent=1 // pred_check_branch
      %1121 = sbr.rel (0) target = $region61
    $region60: #{tpu_custom_call.1} parent=1 // pred_region
      %s1123 = ssub.s32 2048, 2048
      %1124 = vsyncadd [#allocation6], %s1123
      %s1125 = sshll.u32 [#allocation13], 4
      %s1126 = int_to_ptr.vmem [resolvable:$true] %s1125
      %1131 = dma.vmem_to_hbm [thread:$0]  %s1126, 2048, %s7, [#allocation6], 128, 128, 8
    $region61: #{tpu_custom_call.1} parent=1 // pred_fallthru
      _
    // Predicated region
    $region62: #{tpu_custom_call.1} parent=1 // pred_check
      _
    $region63: #{tpu_custom_call.1} parent=1 // pred_check_branch
      %1133 = sbr.rel (0) target = $region65
    $region64: #{tpu_custom_call.1} parent=1 // pred_region
      %1134 = dma.done [#allocation6], 2048
    $region65: #{tpu_custom_call.1} parent=1 // pred_fallthru
      _
    %1135 = vsyncpa [#allocation5], 1
    %1136 = vsyncpa [#allocation8], 1
    %1137 = vsyncpa [#allocation11], 1
    %1138 = vsyncpa [#allocation6], 1

</llo_original>
